<compile_context>
chip_gen: v7x
topology: tpu7x:2x2x1
jax: 0.10.0
libtpu: 0.0.40
codegen_flags: <defaults>
</compile_context>

<pallas_src>
import jax
import jax.numpy as jnp
from jax import lax
from jax.experimental import pallas as pl
from jax.experimental.pallas import tpu as pltpu


def _round_up(n, m):
    return ((n + m - 1) // m) * m


def _discriminator_kernel(x_ref, w1_ref, b1_ref, w2_ref, b2_ref, w3_ref, b3_ref, o_ref):
    # x arrives in its native [TILE_B, 16] layout (no wrapper transpose / extra HBM pass).
    x = x_ref[...].astype(jnp.float32)                                     # [TB, 16]

    # fc1 + ReLU : contract the in_features axis of BOTH operands -> [24, TB].
    # This puts the batch on the LANE axis for every subsequent matmul and for the
    # (unmasked, full-lane) output store; Mosaic handles the operand orientation.
    h1 = lax.dot_general(w1_ref[...], x, (((1,), (1,)), ((), ())),
                         preferred_element_type=jnp.float32) + b1_ref[...]
    h1 = jnp.maximum(h1, 0.0)                                              # [24, TB]

    # fc2 + ReLU : W2 (32,24) @ h1 (24,TB) -> [32, TB]   (all f32)
    h2 = jnp.dot(w2_ref[...], h1, preferred_element_type=jnp.float32) + b2_ref[...]
    h2 = jnp.maximum(h2, 0.0)

    # fc3 : W3 (odim,32) @ h2 (32,TB) -> [odim, TB]
    logits = jnp.dot(w3_ref[...], h2, preferred_element_type=jnp.float32) + b3_ref[...]

    # Softmax over the feature axis (axis 0 here == PyTorch dim=1), numerically stable.
    # Exact divide: one op per 128 columns, hidden under the output DMA.
    m = jnp.max(logits, axis=0, keepdims=True)
    e = jnp.exp(logits - m)
    denom = jnp.sum(e, axis=0, keepdims=True)
    o_ref[...] = (e / denom).astype(o_ref.dtype)


def discriminator_forward(x, params, *, tile_b=2048, min_steps=2, x_dtype=None,
                          batch_major=True):
    """Forward pass of the Discriminator.

    x:        [B, 16] float array (native PyTorch layout; no transpose needed).
    params:   (w1, b1, w2, b2, w3, b3); W_k in PyTorch [out_features, in_features]
              layout, biases shaped [out_features, 1].
    tile_b:   batch tile (lanes per grid step); large tiles amortize the ~0.35 us
              per-step overhead.  VMEM stays a few MB even at tile_b=8192.
    min_steps: keep >= this many grid steps when the batch is big enough, so the
              "parallel" batch axis shards across both TensorCores on v7x.
    x_dtype:  e.g. jnp.bfloat16 to halve the input HBM stream (v5e/v6e/v7x safe —
              the kernel promotes to f32 before any compute).
    batch_major: True -> return [B, odim] (PyTorch layout); False -> return the
              lane-dense [odim, B] slab with no extra transpose pass.
    """
    w1, b1, w2, b2, w3, b3 = params
    odim = w3.shape[0]
    B = x.shape[0]

    w1, w2, w3 = (w.astype(jnp.float32) for w in (w1, w2, w3))
    b1, b2, b3 = (b.astype(jnp.float32) for b in (b1, b2, b3))
    if x_dtype is not None:
        x = x.astype(x_dtype)          # weights stay f32; activations stay f32 in-kernel

    # Pad the batch only up to a lane multiple (<= 127 zero rows).  Any raggedness of
    # b_pad vs. the tile is handled by Pallas boundary-block padding (pl.cdiv grid).
    b_pad = _round_up(B, 128)
    if b_pad != B:
        x = jnp.pad(x, ((0, b_pad - B), (0, 0)))

    # Tile choice: as large as practical, but with >= min_steps grid steps when the
    # batch is large enough (>= min_steps * 1024 rows) that per-step overhead stays
    # amortized — this lets v7x's two TensorCores each take a share of the grid.
    tile = min(_round_up(tile_b, 128), b_pad)
    if pl.cdiv(b_pad, tile) < min_steps and b_pad >= min_steps * 1024:
        tile = _round_up(pl.cdiv(b_pad, min_steps), 128)
    grid = (pl.cdiv(b_pad, tile),)

    in_bytes = jnp.dtype(x.dtype).itemsize
    cost = pl.CostEstimate(
        flops=2 * b_pad * (16 * 24 + 24 * 32 + 32 * odim),
        transcendentals=b_pad * odim,
        bytes_accessed=b_pad * 16 * in_bytes + b_pad * odim * 4
        + int(w1.size + w2.size + w3.size + b1.size + b2.size + b3.size) * 4,
    )

    const = lambda i: (0, 0)  # weights/biases stay VMEM-resident across the batch grid
    out_t = pl.pallas_call(
        _discriminator_kernel,
        out_shape=jax.ShapeDtypeStruct((odim, b_pad), jnp.float32),
        grid=grid,
        in_specs=[
            pl.BlockSpec((tile, 16), lambda i: (i, 0)),   # x in native [B, 16] layout
            pl.BlockSpec(w1.shape, const),
            pl.BlockSpec(b1.shape, const),
            pl.BlockSpec(w2.shape, const),
            pl.BlockSpec(b2.shape, const),
            pl.BlockSpec(w3.shape, const),
            pl.BlockSpec(b3.shape, const),
        ],
        out_specs=pl.BlockSpec((odim, tile), lambda i: (0, i)),
        compiler_params=pltpu.CompilerParams(dimension_semantics=("parallel",)),
        cost_estimate=cost,
    )(x, w1, b1, w2, b2, w3, b3)

    out_t = out_t[:, :B]                                   # [odim, B], lane-dense
    return out_t.T if batch_major else out_t               # [B, odim] matches PyTorch


def discriminator_reference(x, params):
    """Pure-JAX reference matching the PyTorch forward."""
    w1, b1, w2, b2, w3, b3 = params
    h1 = jnp.maximum(x @ w1.T + b1[:, 0], 0.0)
    h2 = jnp.maximum(h1 @ w2.T + b2[:, 0], 0.0)
    logits = h2 @ w3.T + b3[:, 0]
    return jax.nn.softmax(logits, axis=1)


def init_params(key, odim):
    """Deterministic init mimicking nn.Linear's uniform(-1/sqrt(fan_in), 1/sqrt(fan_in)).

    Weights are kept in PyTorch's native [out_features, in_features] layout; biases are
    stored as [out_features, 1] so they broadcast along the lane (batch) axis in-kernel.
    """
    def linear(k, fan_in, fan_out):
        kw, kb = jax.random.split(k)
        bound = 1.0 / (fan_in ** 0.5)
        w = jax.random.uniform(kw, (fan_out, fan_in), jnp.float32, -bound, bound)
        b = jax.random.uniform(kb, (fan_out,), jnp.float32, -bound, bound)
        return w, b.reshape(fan_out, 1)

    k1, k2, k3 = jax.random.split(key, 3)
    w1, b1 = linear(k1, 16, 24)
    w2, b2 = linear(k2, 24, 32)
    w3, b3 = linear(k3, 32, odim)
    return (w1, b1, w2, b2, w3, b3)


if __name__ == "__main__":
    key = jax.random.PRNGKey(0)
    k_params, k_x, k_x2 = jax.random.split(key, 3)

    odim = 10
    params = init_params(k_params, odim)

    # Small-batch case (matches the module's typical use; single grid step).
    batch = 8
    x = jax.random.normal(k_x, (batch, 16), dtype=jnp.float32)
    out = discriminator_forward(x, params)
    out = jax.block_until_ready(out)
    ref = discriminator_reference(x, params)
    assert out.shape == (batch, odim)
    assert jnp.allclose(jnp.sum(out, axis=1), 1.0, atol=1e-4)
    assert jnp.allclose(out, ref, atol=1e-4, rtol=1e-4)

    # Larger, non-tile-aligned batch: exercises the multi-step grid and the ragged
    # (pl.cdiv) boundary block with masked writeback.
    batch2 = 300
    x2 = jax.random.normal(k_x2, (batch2, 16), dtype=jnp.float32)
    out2 = discriminator_forward(x2, params, tile_b=256)
    out2 = jax.block_until_ready(out2)
    ref2 = discriminator_reference(x2, params)
    assert out2.shape == (batch2, odim)
    assert jnp.allclose(jnp.sum(out2, axis=1), 1.0, atol=1e-4)
    assert jnp.allclose(out2, ref2, atol=1e-4, rtol=1e-4)

    print("KERNEL_OK")
</pallas_src>

<mosaic_0001>
module attributes {stable_mosaic.version = 11 : i64} {
  func.func @_discriminator_kernel(%arg0: i32, %arg1: memref<128x16xf32, #tpu.memory_space<vmem>>, %arg2: memref<24x16xf32, #tpu.memory_space<vmem>>, %arg3: memref<24x1xf32, #tpu.memory_space<vmem>>, %arg4: memref<32x24xf32, #tpu.memory_space<vmem>>, %arg5: memref<32x1xf32, #tpu.memory_space<vmem>>, %arg6: memref<10x32xf32, #tpu.memory_space<vmem>>, %arg7: memref<10x1xf32, #tpu.memory_space<vmem>>, %arg8: memref<10x128xf32, #tpu.memory_space<vmem>>) attributes {dimension_semantics = [#tpu.dimension_semantics<parallel>], iteration_bounds = array<i64: 1>, scalar_prefetch = 0 : i64, scratch_operands = 0 : i64, tpu.core_type = #tpu.core_type<tc>, window_params = [{transform_indices = @transform_0, window_bounds = array<i64: 128, 16>}, {pipeline_mode = #tpu.pipeline_mode<synchronous>, transform_indices = @transform_1, window_bounds = array<i64: 24, 16>}, {pipeline_mode = #tpu.pipeline_mode<synchronous>, transform_indices = @transform_2, window_bounds = array<i64: 24, 1>}, {pipeline_mode = #tpu.pipeline_mode<synchronous>, transform_indices = @transform_3, window_bounds = array<i64: 32, 24>}, {pipeline_mode = #tpu.pipeline_mode<synchronous>, transform_indices = @transform_4, window_bounds = array<i64: 32, 1>}, {pipeline_mode = #tpu.pipeline_mode<synchronous>, transform_indices = @transform_5, window_bounds = array<i64: 10, 32>}, {pipeline_mode = #tpu.pipeline_mode<synchronous>, transform_indices = @transform_6, window_bounds = array<i64: 10, 1>}, {transform_indices = @transform_7, window_bounds = array<i64: 10, 128>}]} {
    %c0 = arith.constant 0 : index
    %c0_0 = arith.constant 0 : index
    %0 = vector.load %arg1[%c0, %c0_0] : memref<128x16xf32, #tpu.memory_space<vmem>>, vector<128x16xf32>
    %c0_1 = arith.constant 0 : index
    %c0_2 = arith.constant 0 : index
    %1 = vector.load %arg2[%c0_1, %c0_2] : memref<24x16xf32, #tpu.memory_space<vmem>>, vector<24x16xf32>
    %cst = arith.constant dense<0.000000e+00> : vector<24x128xf32>
    %2 = tpu.matmul %1, %0, %cst {dimension_numbers = #tpu.dot_dimension_numbers<[1], [1], [0], [0], [0, 0, 1, 0], [], []>} : vector<24x16xf32>, vector<128x16xf32>, vector<24x128xf32> -> vector<24x128xf32>
    %c0_3 = arith.constant 0 : index
    %c0_4 = arith.constant 0 : index
    %3 = vector.load %arg3[%c0_3, %c0_4] : memref<24x1xf32, #tpu.memory_space<vmem>>, vector<24x1xf32>
    %4 = vector.broadcast %3 : vector<24x1xf32> to vector<24x128xf32>
    %5 = arith.addf %2, %4 : vector<24x128xf32>
    %cst_5 = arith.constant 0.000000e+00 : f32
    %6 = vector.broadcast %cst_5 : f32 to vector<24x128xf32>
    %7 = arith.maximumf %5, %6 : vector<24x128xf32>
    %c0_6 = arith.constant 0 : index
    %c0_7 = arith.constant 0 : index
    %8 = vector.load %arg4[%c0_6, %c0_7] : memref<32x24xf32, #tpu.memory_space<vmem>>, vector<32x24xf32>
    %cst_8 = arith.constant dense<0.000000e+00> : vector<32x128xf32>
    %9 = tpu.matmul %8, %7, %cst_8 {dimension_numbers = #tpu.dot_dimension_numbers<[1], [0], [0], [1], [0, 0, 1, 1], [], []>} : vector<32x24xf32>, vector<24x128xf32>, vector<32x128xf32> -> vector<32x128xf32>
    %c0_9 = arith.constant 0 : index
    %c0_10 = arith.constant 0 : index
    %10 = vector.load %arg5[%c0_9, %c0_10] : memref<32x1xf32, #tpu.memory_space<vmem>>, vector<32x1xf32>
    %11 = vector.broadcast %10 : vector<32x1xf32> to vector<32x128xf32>
    %12 = arith.addf %9, %11 : vector<32x128xf32>
    %cst_11 = arith.constant 0.000000e+00 : f32
    %13 = vector.broadcast %cst_11 : f32 to vector<32x128xf32>
    %14 = arith.maximumf %12, %13 : vector<32x128xf32>
    %c0_12 = arith.constant 0 : index
    %c0_13 = arith.constant 0 : index
    %15 = vector.load %arg6[%c0_12, %c0_13] : memref<10x32xf32, #tpu.memory_space<vmem>>, vector<10x32xf32>
    %cst_14 = arith.constant dense<0.000000e+00> : vector<10x128xf32>
    %16 = tpu.matmul %15, %14, %cst_14 {dimension_numbers = #tpu.dot_dimension_numbers<[1], [0], [0], [1], [0, 0, 1, 1], [], []>} : vector<10x32xf32>, vector<32x128xf32>, vector<10x128xf32> -> vector<10x128xf32>
    %c0_15 = arith.constant 0 : index
    %c0_16 = arith.constant 0 : index
    %17 = vector.load %arg7[%c0_15, %c0_16] : memref<10x1xf32, #tpu.memory_space<vmem>>, vector<10x1xf32>
    %18 = vector.broadcast %17 : vector<10x1xf32> to vector<10x128xf32>
    %19 = arith.addf %16, %18 : vector<10x128xf32>
    %cst_17 = arith.constant dense<0xFF800000> : vector<128xf32>
    %20 = vector.multi_reduction <maximumf>, %19, %cst_17 [0] : vector<10x128xf32> to vector<128xf32>
    %21 = vector.shape_cast %20 : vector<128xf32> to vector<1x128xf32>
    %22 = vector.broadcast %21 : vector<1x128xf32> to vector<10x128xf32>
    %23 = arith.subf %19, %22 : vector<10x128xf32>
    %24 = math.exp %23 : vector<10x128xf32>
    %cst_18 = arith.constant dense<0.000000e+00> : vector<128xf32>
    %25 = vector.multi_reduction <add>, %24, %cst_18 [0] : vector<10x128xf32> to vector<128xf32>
    %26 = vector.shape_cast %25 : vector<128xf32> to vector<1x128xf32>
    %27 = vector.broadcast %26 : vector<1x128xf32> to vector<10x128xf32>
    %28 = arith.divf %24, %27 : vector<10x128xf32>
    %c0_19 = arith.constant 0 : index
    %c0_20 = arith.constant 0 : index
    %29 = vector.load %arg8[%c0_19, %c0_20] : memref<10x128xf32, #tpu.memory_space<vmem>>, vector<10x128xf32>
    tpu.vector_store %arg8[%c0_19, %c0_20], %28 {strides = array<i32>} : memref<10x128xf32, #tpu.memory_space<vmem>>, vector<10x128xf32>,
    return
  }
  func.func @transform_0(%arg0: i32) -> (i32, i32) {
    %c0_i32 = arith.constant 0 : i32
    %c0_i32_0 = arith.constant 0 : i32
    return %arg0, %c0_i32 : i32, i32
  }
  func.func @transform_1(%arg0: i32) -> (i32, i32) {
    %c0_i32 = arith.constant 0 : i32
    %c0_i32_0 = arith.constant 0 : i32
    %c0_i32_1 = arith.constant 0 : i32
    return %c0_i32, %c0_i32_0 : i32, i32
  }
  func.func @transform_2(%arg0: i32) -> (i32, i32) {
    %c0_i32 = arith.constant 0 : i32
    %c0_i32_0 = arith.constant 0 : i32
    %c0_i32_1 = arith.constant 0 : i32
    return %c0_i32, %c0_i32_0 : i32, i32
  }
  func.func @transform_3(%arg0: i32) -> (i32, i32) {
    %c0_i32 = arith.constant 0 : i32
    %c0_i32_0 = arith.constant 0 : i32
    %c0_i32_1 = arith.constant 0 : i32
    return %c0_i32, %c0_i32_0 : i32, i32
  }
  func.func @transform_4(%arg0: i32) -> (i32, i32) {
    %c0_i32 = arith.constant 0 : i32
    %c0_i32_0 = arith.constant 0 : i32
    %c0_i32_1 = arith.constant 0 : i32
    return %c0_i32, %c0_i32_0 : i32, i32
  }
  func.func @transform_5(%arg0: i32) -> (i32, i32) {
    %c0_i32 = arith.constant 0 : i32
    %c0_i32_0 = arith.constant 0 : i32
    %c0_i32_1 = arith.constant 0 : i32
    return %c0_i32, %c0_i32_0 : i32, i32
  }
  func.func @transform_6(%arg0: i32) -> (i32, i32) {
    %c0_i32 = arith.constant 0 : i32
    %c0_i32_0 = arith.constant 0 : i32
    %c0_i32_1 = arith.constant 0 : i32
    return %c0_i32, %c0_i32_0 : i32, i32
  }
  func.func @transform_7(%arg0: i32) -> (i32, i32) {
    %c0_i32 = arith.constant 0 : i32
    %c0_i32_0 = arith.constant 0 : i32
    return %c0_i32, %arg0 : i32, i32
  }
}

</mosaic_0001>

<llo_original>
// kernel: tpu_custom_call.1
$region0: #{tpu_custom_call.1}
  #allocation0 [shape = 'u32[]', space=smem, size = 0x4, offset = 0x4, fixed_abs, tag = 'smem constant byte address 0x4 - core index']
  #allocation1 [shape = 'u32[144,128]{1,0:T(1,128)}', space=vmem, size = 0x12000, scoped, tag = 'internal scratch']
  %s0 = inlined_call_operand.vmem [shape: f32[128,16], index: 0, kind: input, shape index: {}]
  %s1 = inlined_call_operand.vmem [shape: f32[24,16], index: 1, kind: input, shape index: {}]
  %s2 = inlined_call_operand.vmem [shape: f32[24,1], index: 2, kind: input, shape index: {}]
  %s3 = inlined_call_operand.vmem [shape: f32[32,24], index: 3, kind: input, shape index: {}]
  %s4 = inlined_call_operand.vmem [shape: f32[32,1], index: 4, kind: input, shape index: {}]
  %s5 = inlined_call_operand.vmem [shape: f32[10,32], index: 5, kind: input, shape index: {}]
  %s6 = inlined_call_operand.vmem [shape: f32[10,1], index: 6, kind: input, shape index: {}]
  %s7 = inlined_call_operand.hbm [shape: f32[10,128], index: 7, kind: output, shape index: {}]
  %s8 = sld [smem:[#allocation0]]
  $region38: #{tpu_custom_call.1} parent=0
    _
  %s10 = ssub.s32 1, %s8
  %s11 = scalar_select 0, %s10, %s8
  $region1: #{tpu_custom_call.1} parent=0
    #allocation2 [shape = 'u8[8192]{0}', space=vmem, size = 0x2000, scoped, tag = 'output window, operand 0, single buffered']
    #allocation3 [shape = 's32[1]{0}', space=sflag, size = 0x4, scoped, tag = 'scoped memory for tpu_custom_call.1']
    %12 = vsyncpa [#allocation3], 0
    // Predicated region
    $region2: #{tpu_custom_call.1} parent=1 // pred_check
      _
    $region3: #{tpu_custom_call.1} parent=1 // pred_check_branch
      %14 = sbr.rel (0) target = $region5
    $region4: #{tpu_custom_call.1} parent=1 // pred_region
      _
    $region5: #{tpu_custom_call.1} parent=1 // pred_fallthru
      _
    // Predicated region
    $region6: #{tpu_custom_call.1} parent=1 // pred_check
      _
    $region7: #{tpu_custom_call.1} parent=1 // pred_check_branch
      %16 = sbr.rel (0) target = $region9
    $region8: #{tpu_custom_call.1} parent=1 // pred_region
      _
    $region9: #{tpu_custom_call.1} parent=1 // pred_fallthru
      _
    // Predicated region
    $region10: #{tpu_custom_call.1} parent=1 // pred_check
      _
    $region11: #{tpu_custom_call.1} parent=1 // pred_check_branch
      %18 = sbr.rel (0) target = $region13
    $region12: #{tpu_custom_call.1} parent=1 // pred_region
      _
    $region13: #{tpu_custom_call.1} parent=1 // pred_fallthru
      _
    // Predicated region
    $region14: #{tpu_custom_call.1} parent=1 // pred_check
      _
    $region15: #{tpu_custom_call.1} parent=1 // pred_check_branch
      %20 = sbr.rel (0) target = $region17
    $region16: #{tpu_custom_call.1} parent=1 // pred_region
      _
    $region17: #{tpu_custom_call.1} parent=1 // pred_fallthru
      _
    // Predicated region
    $region18: #{tpu_custom_call.1} parent=1 // pred_check
      _
    $region19: #{tpu_custom_call.1} parent=1 // pred_check_branch
      %22 = sbr.rel (0) target = $region21
    $region20: #{tpu_custom_call.1} parent=1 // pred_region
      _
    $region21: #{tpu_custom_call.1} parent=1 // pred_fallthru
      _
    // Predicated region
    $region22: #{tpu_custom_call.1} parent=1 // pred_check
      _
    $region23: #{tpu_custom_call.1} parent=1 // pred_check_branch
      %24 = sbr.rel (0) target = $region25
    $region24: #{tpu_custom_call.1} parent=1 // pred_region
      _
    $region25: #{tpu_custom_call.1} parent=1 // pred_fallthru
      _
    // Predicated region
    $region26: #{tpu_custom_call.1} parent=1 // pred_check
      _
    $region27: #{tpu_custom_call.1} parent=1 // pred_check_branch
      %26 = sbr.rel (0) target = $region29
    $region28: #{tpu_custom_call.1} parent=1 // pred_region
      _
    $region29: #{tpu_custom_call.1} parent=1 // pred_fallthru
      _
    %v27 = vld [vmem:[%s0] sm:$0xff]
    %v28 = vld [vmem:[%s0 + $0x8] sm:$0xff]
    %v29 = vld [vmem:[%s0 + $0x10] sm:$0xff]
    %v30 = vld [vmem:[%s0 + $0x18] sm:$0xff]
    %v31 = vld [vmem:[%s0 + $0x20] sm:$0xff]
    %v32 = vld [vmem:[%s0 + $0x28] sm:$0xff]
    %v33 = vld [vmem:[%s0 + $0x30] sm:$0xff]
    %v34 = vld [vmem:[%s0 + $0x38] sm:$0xff]
    %v35 = vld [vmem:[%s0 + $0x40] sm:$0xff]
    %v36 = vld [vmem:[%s0 + $0x48] sm:$0xff]
    %v37 = vld [vmem:[%s0 + $0x50] sm:$0xff]
    %v38 = vld [vmem:[%s0 + $0x58] sm:$0xff]
    %v39 = vld [vmem:[%s0 + $0x60] sm:$0xff]
    %v40 = vld [vmem:[%s0 + $0x68] sm:$0xff]
    %v41 = vld [vmem:[%s0 + $0x70] sm:$0xff]
    %v42 = vld [vmem:[%s0 + $0x78] sm:$0xff]
    %v43 = vld [vmem:[%s1] sm:$0xff]
    %v44 = vld [vmem:[%s1 + $0x8] sm:$0xff]
    %v45 = vld [vmem:[%s1 + $0x10] sm:$0xff]
    %v46 = vld [vmem:[%s2] sm:$0xff]
    %v47 = vld [vmem:[%s2 + $0x8] sm:$0xff]
    %v48 = vld [vmem:[%s2 + $0x10] sm:$0xff]
    %50 = vset.pattern.permute.xlu0 0
    %51 = vperm.xlu0 %50, %v46
    %v52 = vpop.permute.xlu0 %51
    %55 = vset.pattern.permute.xlu0 0
    %56 = vperm.xlu0 %55, %v47
    %v57 = vpop.permute.xlu0 %56
    %60 = vset.pattern.permute.xlu0 0
    %61 = vperm.xlu0 %60, %v48
    %v62 = vpop.permute.xlu0 %61
    %vm64 = vcmask 130048
    %v66 = vsel %vm64, %v43, 0
    %v69 = vsel %vm64, %v44, 0
    %v72 = vsel %vm64, %v45, 0
    %v75 = vsel %vm64, %v27, 0
    %v78 = vsel %vm64, %v28, 0
    %v81 = vsel %vm64, %v29, 0
    %v84 = vsel %vm64, %v30, 0
    %v87 = vsel %vm64, %v31, 0
    %v90 = vsel %vm64, %v32, 0
    %v93 = vsel %vm64, %v33, 0
    %v96 = vsel %vm64, %v34, 0
    %v99 = vsel %vm64, %v35, 0
    %v102 = vsel %vm64, %v36, 0
    %v105 = vsel %vm64, %v37, 0
    %v108 = vsel %vm64, %v38, 0
    %v111 = vsel %vm64, %v39, 0
    %v114 = vsel %vm64, %v40, 0
    %v117 = vsel %vm64, %v41, 0
    %v120 = vsel %vm64, %v42, 0
    %122 = vmatprep.subr.mxu0 0.0
    %123 = vmatpush1.xpose.msra.mxu0 %v75
    %124 = vmatprep.subr.mxu0 0.0
    %125 = vmatpush1.xpose.msra.mxu0 %v78
    %126 = vmatprep.subr.mxu0 0.0
    %127 = vmatpush1.xpose.msra.mxu0 %v81
    %128 = vmatprep.subr.mxu0 0.0
    %129 = vmatpush1.xpose.msra.mxu0 %v84
    %130 = vmatprep.subr.mxu0 0.0
    %131 = vmatpush1.xpose.msra.mxu0 %v87
    %132 = vmatprep.subr.mxu0 0.0
    %133 = vmatpush1.xpose.msra.mxu0 %v90
    %134 = vmatprep.subr.mxu0 0.0
    %135 = vmatpush1.xpose.msra.mxu0 %v93
    %136 = vmatprep.subr.mxu0 0.0
    %137 = vmatpush1.xpose.msra.mxu0 %v96
    %138 = vmatprep.subr.mxu0 0.0
    %139 = vmatpush1.xpose.msra.mxu0 %v99
    %140 = vmatprep.subr.mxu0 0.0
    %141 = vmatpush1.xpose.msra.mxu0 %v102
    %142 = vmatprep.subr.mxu0 0.0
    %143 = vmatpush1.xpose.msra.mxu0 %v105
    %144 = vmatprep.subr.mxu0 0.0
    %145 = vmatpush1.xpose.msra.mxu0 %v108
    %146 = vmatprep.subr.mxu0 0.0
    %147 = vmatpush1.xpose.msra.mxu0 %v111
    %148 = vmatprep.subr.mxu0 0.0
    %149 = vmatpush1.xpose.msra.mxu0 %v114
    %150 = vmatprep.subr.mxu0 0.0
    %151 = vmatpush1.xpose.msra.mxu0 %v117
    %152 = vmatprep.subr.mxu0 0.0
    %153 = vmatpush1.xpose.msra.mxu0 %v120
    %154 = vmatprep.subr.mxu0 0.0
    %155 = vmatpush1.xpose.msra.mxu0 0.0
    %156 = vmatprep.subr.mxu0 0.0
    %157 = vmatpush1.xpose.msra.mxu0 0.0
    %158 = vmatprep.subr.mxu0 0.0
    %159 = vmatpush1.xpose.msra.mxu0 0.0
    %160 = vmatprep.subr.mxu0 0.0
    %161 = vmatpush1.xpose.msra.mxu0 0.0
    %162 = vmatprep.subr.mxu0 0.0
    %163 = vmatpush1.xpose.msra.mxu0 0.0
    %164 = vmatprep.subr.mxu0 0.0
    %165 = vmatpush1.xpose.msra.mxu0 0.0
    %166 = vmatprep.subr.mxu0 0.0
    %167 = vmatpush1.xpose.msra.mxu0 0.0
    %168 = vmatprep.subr.mxu0 0.0
    %169 = vmatpush1.xpose.msra.mxu0 0.0
    %170 = vmatprep.subr.mxu0 0.0
    %171 = vmatpush1.xpose.msra.mxu0 0.0
    %172 = vmatprep.subr.mxu0 0.0
    %173 = vmatpush1.xpose.msra.mxu0 0.0
    %174 = vmatprep.subr.mxu0 0.0
    %175 = vmatpush1.xpose.msra.mxu0 0.0
    %176 = vmatprep.subr.mxu0 0.0
    %177 = vmatpush1.xpose.msra.mxu0 0.0
    %178 = vmatprep.subr.mxu0 0.0
    %179 = vmatpush1.xpose.msra.mxu0 0.0
    %180 = vmatprep.subr.mxu0 0.0
    %181 = vmatpush1.xpose.msra.mxu0 0.0
    %182 = vmatprep.subr.mxu0 0.0
    %183 = vmatpush1.xpose.msra.mxu0 0.0
    %184 = vmatprep.subr.mxu0 0.0
    %185 = vmatpush1.xpose.msra.mxu0 0.0
    %186 = vmatprep.mubr.f32.mxu0 0.0
    %187 = vmatmul.mubr.f32.gmra.mrb[0].mxu0 %v66
    %v188 = vpop.f32.mrb[0].mxu0
    %v189 = vadd.f32 %v52, %v188
    %v190 = vpop.f32.mrb[0].mxu0
    %191 = vmatprep.mubr.f32.mxu0 0.0
    %192 = vmatmul.mubr.f32.gmra.mrb[0].mxu0 %v69
    %v193 = vpop.f32.mrb[0].mxu0
    %v194 = vadd.f32 %v57, %v193
    %v195 = vpop.f32.mrb[0].mxu0
    %196 = vmatprep.mubr.f32.mxu0 0.0
    %197 = vmatmul.mubr.f32.gmra.mrb[0].mxu0 %v72
    %v198 = vpop.f32.mrb[0].mxu0
    %v199 = vadd.f32 %v62, %v198
    %v200 = vpop.f32.mrb[0].mxu0
    %201 = vdwg.mxu0
    %v202 = vmax.f32 %v189, 0.0
    %v203 = vmax.f32 %v194, 0.0
    %v204 = vmax.f32 %v199, 0.0
    %v205 = vld [vmem:[%s3] sm:$0xff]
    %v206 = vld [vmem:[%s3 + $0x8] sm:$0xff]
    %v207 = vld [vmem:[%s3 + $0x10] sm:$0xff]
    %v208 = vld [vmem:[%s3 + $0x18] sm:$0xff]
    %v209 = vld [vmem:[%s4] sm:$0xff]
    %v210 = vld [vmem:[%s4 + $0x8] sm:$0xff]
    %v211 = vld [vmem:[%s4 + $0x10] sm:$0xff]
    %v212 = vld [vmem:[%s4 + $0x18] sm:$0xff]
    %214 = vset.pattern.permute.xlu0 0
    %215 = vperm.xlu0 %214, %v209
    %v216 = vpop.permute.xlu0 %215
    %219 = vset.pattern.permute.xlu0 0
    %220 = vperm.xlu0 %219, %v210
    %v221 = vpop.permute.xlu0 %220
    %224 = vset.pattern.permute.xlu0 0
    %225 = vperm.xlu0 %224, %v211
    %v226 = vpop.permute.xlu0 %225
    %229 = vset.pattern.permute.xlu0 0
    %230 = vperm.xlu0 %229, %v212
    %v231 = vpop.permute.xlu0 %230
    %vm233 = vcmask 195584
    %v235 = vsel %vm233, %v205, 0
    %v238 = vsel %vm233, %v206, 0
    %v241 = vsel %vm233, %v207, 0
    %v244 = vsel %vm233, %v208, 0
    %246 = vmatprep.subr.mxu0 0.0
    %247 = vmatpush1.msra.mxu0 %v202
    %248 = vmatprep.subr.mxu0 0.0
    %249 = vmatpush1.msra.mxu0 %v203
    %250 = vmatprep.subr.mxu0 0.0
    %251 = vmatpush1.msra.mxu0 %v204
    %252 = vmatprep.subr.mxu0 0.0
    %253 = vmatpush1.msra.mxu0 0.0
    %254 = vmatprep.subr.mxu0 0.0
    %255 = vmatpush1.msra.mxu0 0.0
    %256 = vmatprep.subr.mxu0 0.0
    %257 = vmatpush1.msra.mxu0 0.0
    %258 = vmatprep.subr.mxu0 0.0
    %259 = vmatpush1.msra.mxu0 0.0
    %260 = vmatprep.subr.mxu0 0.0
    %261 = vmatpush1.msra.mxu0 0.0
    %262 = vmatprep.subr.mxu0 0.0
    %263 = vmatpush1.msra.mxu0 0.0
    %264 = vmatprep.subr.mxu0 0.0
    %265 = vmatpush1.msra.mxu0 0.0
    %266 = vmatprep.subr.mxu0 0.0
    %267 = vmatpush1.msra.mxu0 0.0
    %268 = vmatprep.subr.mxu0 0.0
    %269 = vmatpush1.msra.mxu0 0.0
    %270 = vmatprep.subr.mxu0 0.0
    %271 = vmatpush1.msra.mxu0 0.0
    %272 = vmatprep.subr.mxu0 0.0
    %273 = vmatpush1.msra.mxu0 0.0
    %274 = vmatprep.subr.mxu0 0.0
    %275 = vmatpush1.msra.mxu0 0.0
    %276 = vmatprep.subr.mxu0 0.0
    %277 = vmatpush1.msra.mxu0 0.0
    %278 = vmatprep.subr.mxu0 0.0
    %279 = vmatpush1.msra.mxu0 0.0
    %280 = vmatprep.subr.mxu0 0.0
    %281 = vmatpush1.msra.mxu0 0.0
    %282 = vmatprep.subr.mxu0 0.0
    %283 = vmatpush1.msra.mxu0 0.0
    %284 = vmatprep.subr.mxu0 0.0
    %285 = vmatpush1.msra.mxu0 0.0
    %286 = vmatprep.subr.mxu0 0.0
    %287 = vmatpush1.msra.mxu0 0.0
    %288 = vmatprep.subr.mxu0 0.0
    %289 = vmatpush1.msra.mxu0 0.0
    %290 = vmatprep.subr.mxu0 0.0
    %291 = vmatpush1.msra.mxu0 0.0
    %292 = vmatprep.subr.mxu0 0.0
    %293 = vmatpush1.msra.mxu0 0.0
    %294 = vmatprep.subr.mxu0 0.0
    %295 = vmatpush1.msra.mxu0 0.0
    %296 = vmatprep.subr.mxu0 0.0
    %297 = vmatpush1.msra.mxu0 0.0
    %298 = vmatprep.subr.mxu0 0.0
    %299 = vmatpush1.msra.mxu0 0.0
    %300 = vmatprep.subr.mxu0 0.0
    %301 = vmatpush1.msra.mxu0 0.0
    %302 = vmatprep.subr.mxu0 0.0
    %303 = vmatpush1.msra.mxu0 0.0
    %304 = vmatprep.subr.mxu0 0.0
    %305 = vmatpush1.msra.mxu0 0.0
    %306 = vmatprep.subr.mxu0 0.0
    %307 = vmatpush1.msra.mxu0 0.0
    %308 = vmatprep.subr.mxu0 0.0
    %309 = vmatpush1.msra.mxu0 0.0
    %310 = vmatprep.mubr.f32.mxu0 0.0
    %311 = vmatmul.mubr.f32.gmra.mrb[0].mxu0 %v235
    %v312 = vpop.f32.mrb[0].mxu0
    %v313 = vadd.f32 %v216, %v312
    %v314 = vpop.f32.mrb[0].mxu0
    %315 = vmatprep.mubr.f32.mxu0 0.0
    %316 = vmatmul.mubr.f32.gmra.mrb[0].mxu0 %v238
    %v317 = vpop.f32.mrb[0].mxu0
    %v318 = vadd.f32 %v221, %v317
    %v319 = vpop.f32.mrb[0].mxu0
    %320 = vmatprep.mubr.f32.mxu0 0.0
    %321 = vmatmul.mubr.f32.gmra.mrb[0].mxu0 %v241
    %v322 = vpop.f32.mrb[0].mxu0
    %v323 = vadd.f32 %v226, %v322
    %v324 = vpop.f32.mrb[0].mxu0
    %325 = vmatprep.mubr.f32.mxu0 0.0
    %326 = vmatmul.mubr.f32.gmra.mrb[0].mxu0 %v244
    %v327 = vpop.f32.mrb[0].mxu0
    %v328 = vadd.f32 %v231, %v327
    %v329 = vpop.f32.mrb[0].mxu0
    %330 = vdwg.mxu0
    %v331 = vmax.f32 %v313, 0.0
    %v332 = vmax.f32 %v318, 0.0
    %v333 = vmax.f32 %v323, 0.0
    %v334 = vmax.f32 %v328, 0.0
    %v335 = vld [vmem:[%s5] sm:$0xff]
    %v336 = vld [vmem:[%s5 + $0x8] sm:$0x3]
    %v337 = vld [vmem:[%s6] sm:$0xff]
    %v338 = vld [vmem:[%s6 + $0x8] sm:$0x3]
    %340 = vset.pattern.permute.xlu0 0
    %341 = vperm.xlu0 %340, %v337
    %v342 = vpop.permute.xlu0 %341
    %345 = vset.pattern.permute.xlu0 0
    %346 = vperm.xlu0 %345, %v338
    %v347 = vpop.permute.xlu0 %346
    %vm349 = vcmask 261120
    %v351 = vsel %vm349, %v335, 0
    %v354 = vsel %vm349, %v336, 0
    %356 = vmatprep.subr.mxu0 0.0
    %357 = vmatpush1.msra.mxu0 %v331
    %358 = vmatprep.subr.mxu0 0.0
    %359 = vmatpush1.msra.mxu0 %v332
    %360 = vmatprep.subr.mxu0 0.0
    %361 = vmatpush1.msra.mxu0 %v333
    %362 = vmatprep.subr.mxu0 0.0
    %363 = vmatpush1.msra.mxu0 %v334
    %364 = vmatprep.subr.mxu0 0.0
    %365 = vmatpush1.msra.mxu0 0.0
    %366 = vmatprep.subr.mxu0 0.0
    %367 = vmatpush1.msra.mxu0 0.0
    %368 = vmatprep.subr.mxu0 0.0
    %369 = vmatpush1.msra.mxu0 0.0
    %370 = vmatprep.subr.mxu0 0.0
    %371 = vmatpush1.msra.mxu0 0.0
    %372 = vmatprep.subr.mxu0 0.0
    %373 = vmatpush1.msra.mxu0 0.0
    %374 = vmatprep.subr.mxu0 0.0
    %375 = vmatpush1.msra.mxu0 0.0
    %376 = vmatprep.subr.mxu0 0.0
    %377 = vmatpush1.msra.mxu0 0.0
    %378 = vmatprep.subr.mxu0 0.0
    %379 = vmatpush1.msra.mxu0 0.0
    %380 = vmatprep.subr.mxu0 0.0
    %381 = vmatpush1.msra.mxu0 0.0
    %382 = vmatprep.subr.mxu0 0.0
    %383 = vmatpush1.msra.mxu0 0.0
    %384 = vmatprep.subr.mxu0 0.0
    %385 = vmatpush1.msra.mxu0 0.0
    %386 = vmatprep.subr.mxu0 0.0
    %387 = vmatpush1.msra.mxu0 0.0
    %388 = vmatprep.subr.mxu0 0.0
    %389 = vmatpush1.msra.mxu0 0.0
    %390 = vmatprep.subr.mxu0 0.0
    %391 = vmatpush1.msra.mxu0 0.0
    %392 = vmatprep.subr.mxu0 0.0
    %393 = vmatpush1.msra.mxu0 0.0
    %394 = vmatprep.subr.mxu0 0.0
    %395 = vmatpush1.msra.mxu0 0.0
    %396 = vmatprep.subr.mxu0 0.0
    %397 = vmatpush1.msra.mxu0 0.0
    %398 = vmatprep.subr.mxu0 0.0
    %399 = vmatpush1.msra.mxu0 0.0
    %400 = vmatprep.subr.mxu0 0.0
    %401 = vmatpush1.msra.mxu0 0.0
    %402 = vmatprep.subr.mxu0 0.0
    %403 = vmatpush1.msra.mxu0 0.0
    %404 = vmatprep.subr.mxu0 0.0
    %405 = vmatpush1.msra.mxu0 0.0
    %406 = vmatprep.subr.mxu0 0.0
    %407 = vmatpush1.msra.mxu0 0.0
    %408 = vmatprep.subr.mxu0 0.0
    %409 = vmatpush1.msra.mxu0 0.0
    %410 = vmatprep.subr.mxu0 0.0
    %411 = vmatpush1.msra.mxu0 0.0
    %412 = vmatprep.subr.mxu0 0.0
    %413 = vmatpush1.msra.mxu0 0.0
    %414 = vmatprep.subr.mxu0 0.0
    %415 = vmatpush1.msra.mxu0 0.0
    %416 = vmatprep.subr.mxu0 0.0
    %417 = vmatpush1.msra.mxu0 0.0
    %418 = vmatprep.subr.mxu0 0.0
    %419 = vmatpush1.msra.mxu0 0.0
    %420 = vmatprep.mubr.f32.mxu0 0.0
    %421 = vmatmul.mubr.f32.gmra.mrb[0].mxu0 %v351
    %v422 = vpop.f32.mrb[0].mxu0
    %v423 = vadd.f32 %v342, %v422
    %v424 = vpop.f32.mrb[0].mxu0
    %425 = vmatprep.mubr.f32.mxu0 0.0
    %426 = vmatmul.mubr.f32.gmra.mrb[0].mxu0 %v354
    %v427 = vpop.f32.mrb[0].mxu0
    %v428 = vadd.f32 %v347, %v427
    %v429 = vpop.f32.mrb[0].mxu0
    %430 = vdwg.mxu0
    %vm431 = vcmask 1041408
    %v432 = vsel %vm431, %v428, -inf
    %v433 = vmax.f32 %v423, %v432
    %v434 = vrot.slane %v433, 4
    %v435 = vmax.f32 %v433, %v434
    %v436 = vrot.slane %v435, 2
    %v437 = vmax.f32 %v435, %v436
    %v438 = vrot.slane %v437, 1
    %v439 = vmax.f32 %v437, %v438
    %v440 = vsub.f32 %v423, %v439
    %v441 = vsub.f32 %v428, %v439
    %v442 = vmul.f32 %v440, 1.442695
    %v443 = vpow.pop %v442
    %v444 = vmul.f32 %v441, 1.442695
    %v445 = vpow.pop %v444
    %v446 = vsel %vm431, %v445, 0.0
    %v447 = vadd.f32 %v443, %v446
    %v448 = vrot.slane %v447, 4
    %v449 = vadd.f32 %v447, %v448
    %v450 = vrot.slane %v449, 2
    %v451 = vadd.f32 %v449, %v450
    %v452 = vrot.slane %v451, 1
    %v453 = vadd.f32 %v451, %v452
    %v454 = vrcp.pop %v453
    %v455 = vmul.f32 %v443, %v454
    %v456 = vmul.f32 %v445, %v454
    %457 = vst [vmem:[#allocation2] sm:$0xff] %v455
    %458 = vst [vmem:[#allocation2 + $0x8] sm:$0x3] %v456
    // Predicated region
    $region30: #{tpu_custom_call.1} parent=1 // pred_check
      _
    $region31: #{tpu_custom_call.1} parent=1 // pred_check_branch
      %460 = sbr.rel (0) target = $region33
    $region32: #{tpu_custom_call.1} parent=1 // pred_region
      %s462 = ssub.s32 256, 256
      %463 = vsyncadd [#allocation3], %s462
      %s464 = sshll.u32 [#allocation2], 4
      %s465 = int_to_ptr.vmem [resolvable:$true] %s464
      %470 = dma.vmem_to_hbm [thread:$0]  %s465, 256, %s7, [#allocation3], 128, 128, 8
    $region33: #{tpu_custom_call.1} parent=1 // pred_fallthru
      _
    // Predicated region
    $region34: #{tpu_custom_call.1} parent=1 // pred_check
      _
    $region35: #{tpu_custom_call.1} parent=1 // pred_check_branch
      %472 = sbr.rel (0) target = $region37
    $region36: #{tpu_custom_call.1} parent=1 // pred_region
      %473 = dma.done [#allocation3], 256
    $region37: #{tpu_custom_call.1} parent=1 // pred_fallthru
      _
    %474 = vsyncpa [#allocation3], 1

</llo_original>
